<compile_context>
chip_gen: v6e
topology: v6e:2x2x1
jax: 0.10.0
libtpu: 0.0.40
codegen_flags: <defaults>
</compile_context>

<pallas_src>
import functools

import jax
import jax.numpy as jnp
from jax.experimental import pallas as pl
from jax.experimental.pallas import tpu as pltpu


# ---------------------------------------------------------------------------
# Fused kernel: out = sigmoid(relu(x @ W1t + b1) @ W2t + b2)
# ---------------------------------------------------------------------------
def vnet_kernel(x_ref, w1t_ref, b1_ref, w2t_ref, b2_ref, out_ref):
    x = x_ref[...]                                          # (TILE_B, IN)
    h = jnp.dot(x, w1t_ref[...],
                preferred_element_type=jnp.float32) + b1_ref[...]
    h = jnp.maximum(h, 0.0)                                 # ReLU, stays in VMEM
    logits = jnp.dot(h, w2t_ref[...],
                     preferred_element_type=jnp.float32) + b2_ref[...]
    out_ref[...] = jax.nn.sigmoid(logits).astype(out_ref.dtype)


def _round_up(n, m):
    return pl.cdiv(n, m) * m


# Conservative working-set budget so the same tile choice fits v7x (64 MiB
# physical VMEM) as well as v5e/v6e.
_VMEM_BUDGET_BYTES = 40 * 1024 * 1024


def _fused_vmem_bytes(tile_b, in_f, h1, out_pad):
    """Estimate of the kernel's VMEM working set (f32 everywhere)."""
    weights = 4 * (in_f * h1 + h1 * out_pad + h1 + out_pad)   # single-buffered residents
    io = 2 * 4 * tile_b * (in_f + out_pad)                    # double-buffered x / out tiles
    hidden = 4 * tile_b * h1                                  # live hidden activation
    return weights + io + hidden


# ---------------------------------------------------------------------------
# One-time parameter preparation (hoisted out of the per-call path).
# PyTorch layout in: w1 (H1, IN), b1 (H1,), w2 (OUT, H1), b2 (OUT,).
# ---------------------------------------------------------------------------
def prepare_vnet_params(params):
    h1, in_f = params["w1"].shape
    out_f = params["w2"].shape[0]
    out_pad = _round_up(max(out_f, 128), 128)   # lane-dense output slab width

    w1t = jnp.asarray(params["w1"]).T                                   # (IN, H1)
    b1 = jnp.asarray(params["b1"]).reshape(1, h1)                       # (1, H1)
    w2t = jnp.asarray(params["w2"]).T                                   # (H1, OUT)
    w2t_p = jnp.zeros((h1, out_pad), w2t.dtype).at[:, :out_f].set(w2t)  # (H1, OUT_PAD)
    b2_p = jnp.zeros((1, out_pad), params["b2"].dtype).at[0, :out_f].set(
        jnp.asarray(params["b2"]))                                      # (1, OUT_PAD)

    prepared = {"w1t": w1t, "b1": b1, "w2t_p": w2t_p, "b2_p": b2_p}
    return prepared, out_f


# ---------------------------------------------------------------------------
# Forward: only the fused pallas_call (plus cheap batch padding) per call.
# ---------------------------------------------------------------------------
@functools.partial(jax.jit, static_argnames=("out_features", "tile_b"))
def vnet_forward(prepared, x, *, out_features, tile_b=512):
    B, IN = x.shape
    H1 = prepared["w1t"].shape[1]
    out_pad = prepared["w2t_p"].shape[1]

    # --- batch tile selection (all static Python ints at trace time) -------
    b_pad8 = _round_up(B, 8)
    tile = max(8, _round_up(min(tile_b, b_pad8), 8))

    # Shrink the tile until the fused working set fits the v7x-safe budget.
    while tile > 8 and _fused_vmem_bytes(tile, IN, H1, out_pad) > _VMEM_BUDGET_BYTES:
        tile = max(8, _round_up(tile // 2, 8))

    # v7x megacore: prefer >= 2 batch tiles so both TensorCores get work.
    if b_pad8 // tile < 2 <= b_pad8 // 8:
        tile = max(8, _round_up(pl.cdiv(b_pad8, 2), 8))

    b_pad = _round_up(B, tile)
    x_p = x if b_pad == B else jnp.zeros((b_pad, IN), x.dtype).at[:B].set(x)

    grid = (b_pad // tile,)

    needed = _fused_vmem_bytes(tile, IN, H1, out_pad)
    vmem_limit = int(min(48 * 1024 * 1024, max(2 * needed, 32 * 1024 * 1024)))

    resident = pl.Buffered(1)   # constant block index -> single buffer, not 2

    out = pl.pallas_call(
        vnet_kernel,
        out_shape=jax.ShapeDtypeStruct((b_pad, out_pad), x.dtype),
        grid=grid,
        in_specs=[
            pl.BlockSpec((tile, IN), lambda i: (i, 0)),                          # x tile
            pl.BlockSpec((IN, H1), lambda i: (0, 0), pipeline_mode=resident),    # W1^T
            pl.BlockSpec((1, H1), lambda i: (0, 0), pipeline_mode=resident),     # b1
            pl.BlockSpec((H1, out_pad), lambda i: (0, 0), pipeline_mode=resident),  # W2^T pad
            pl.BlockSpec((1, out_pad), lambda i: (0, 0), pipeline_mode=resident),   # b2 pad
        ],
        out_specs=pl.BlockSpec((tile, out_pad), lambda i: (i, 0)),
        compiler_params=pltpu.CompilerParams(
            dimension_semantics=("parallel",),        # batch tiles shard across TCs
            vmem_limit_bytes=vmem_limit,
        ),
    )(x_p, prepared["w1t"], prepared["b1"], prepared["w2t_p"], prepared["b2_p"])

    return out[:B, :out_features]


# ---------------------------------------------------------------------------
# Pure-JAX reference for correctness checking.
# ---------------------------------------------------------------------------
def vnet_reference(params, x):
    h = jnp.maximum(x @ params["w1"].T + params["b1"], 0.0)
    logits = h @ params["w2"].T + params["b2"]
    return jax.nn.sigmoid(logits)


if __name__ == "__main__":
    # Small shapes consistent with VNet(input, hidden1, output).
    B = 16      # batch (gives a 2-step batch grid -> exercises megacore path)
    IN = 32     # input features
    H1 = 32     # hidden1
    OUT = 16    # output

    key = jax.random.PRNGKey(0)
    k_x, k_w1, k_b1, k_w2, k_b2 = jax.random.split(key, 5)

    x = jax.random.normal(k_x, (B, IN), dtype=jnp.float32)
    params = {
        "w1": jax.random.normal(k_w1, (H1, IN), dtype=jnp.float32) * 0.1,
        "b1": jax.random.normal(k_b1, (H1,), dtype=jnp.float32) * 0.1,
        "w2": jax.random.normal(k_w2, (OUT, H1), dtype=jnp.float32) * 0.1,
        "b2": jax.random.normal(k_b2, (OUT,), dtype=jnp.float32) * 0.1,
    }

    # One-time prep (transpose + lane padding), outside the per-call path.
    prepared, out_features = prepare_vnet_params(params)

    out = vnet_forward(prepared, x, out_features=out_features)
    out = jax.block_until_ready(out)

    ref = vnet_reference(params, x)
    assert out.shape == (B, OUT)
    assert jnp.allclose(out, ref, atol=1e-5, rtol=1e-5), "mismatch vs reference"

    print("KERNEL_OK")
</pallas_src>

<mosaic_0001>
module attributes {stable_mosaic.version = 11 : i64} {
  func.func @vnet_kernel(%arg0: i32, %arg1: memref<8x32xf32, #tpu.memory_space<vmem>>, %arg2: memref<32x32xf32, #tpu.memory_space<vmem>>, %arg3: memref<1x32xf32, #tpu.memory_space<vmem>>, %arg4: memref<32x128xf32, #tpu.memory_space<vmem>>, %arg5: memref<1x128xf32, #tpu.memory_space<vmem>>, %arg6: memref<8x128xf32, #tpu.memory_space<vmem>>) attributes {dimension_semantics = [#tpu.dimension_semantics<parallel>], iteration_bounds = array<i64: 2>, scalar_prefetch = 0 : i64, scratch_operands = 0 : i64, tpu.core_type = #tpu.core_type<tc>, window_params = [{transform_indices = @transform_0, window_bounds = array<i64: 8, 32>}, {pipeline_mode = #tpu.pipeline_mode<synchronous>, transform_indices = @transform_1, window_bounds = array<i64: 32, 32>}, {pipeline_mode = #tpu.pipeline_mode<synchronous>, transform_indices = @transform_2, window_bounds = array<i64: 1, 32>}, {pipeline_mode = #tpu.pipeline_mode<synchronous>, transform_indices = @transform_3, window_bounds = array<i64: 32, 128>}, {pipeline_mode = #tpu.pipeline_mode<synchronous>, transform_indices = @transform_4, window_bounds = array<i64: 1, 128>}, {transform_indices = @transform_5, window_bounds = array<i64: 8, 128>}]} {
    %c0 = arith.constant 0 : index
    %c0_0 = arith.constant 0 : index
    %0 = vector.load %arg1[%c0, %c0_0] : memref<8x32xf32, #tpu.memory_space<vmem>>, vector<8x32xf32>
    %c0_1 = arith.constant 0 : index
    %c0_2 = arith.constant 0 : index
    %1 = vector.load %arg2[%c0_1, %c0_2] : memref<32x32xf32, #tpu.memory_space<vmem>>, vector<32x32xf32>
    %cst = arith.constant dense<0.000000e+00> : vector<8x32xf32>
    %2 = tpu.matmul %0, %1, %cst {dimension_numbers = #tpu.dot_dimension_numbers<[1], [0], [0], [1], [0, 0, 1, 1], [], []>} : vector<8x32xf32>, vector<32x32xf32>, vector<8x32xf32> -> vector<8x32xf32>
    %c0_3 = arith.constant 0 : index
    %c0_4 = arith.constant 0 : index
    %3 = vector.load %arg3[%c0_3, %c0_4] : memref<1x32xf32, #tpu.memory_space<vmem>>, vector<1x32xf32>
    %4 = vector.broadcast %3 : vector<1x32xf32> to vector<8x32xf32>
    %5 = arith.addf %2, %4 : vector<8x32xf32>
    %cst_5 = arith.constant 0.000000e+00 : f32
    %6 = vector.broadcast %cst_5 : f32 to vector<8x32xf32>
    %7 = arith.maximumf %5, %6 : vector<8x32xf32>
    %c0_6 = arith.constant 0 : index
    %c0_7 = arith.constant 0 : index
    %8 = vector.load %arg4[%c0_6, %c0_7] : memref<32x128xf32, #tpu.memory_space<vmem>>, vector<32x128xf32>
    %cst_8 = arith.constant dense<0.000000e+00> : vector<8x128xf32>
    %9 = tpu.matmul %7, %8, %cst_8 {dimension_numbers = #tpu.dot_dimension_numbers<[1], [0], [0], [1], [0, 0, 1, 1], [], []>} : vector<8x32xf32>, vector<32x128xf32>, vector<8x128xf32> -> vector<8x128xf32>
    %c0_9 = arith.constant 0 : index
    %c0_10 = arith.constant 0 : index
    %10 = vector.load %arg5[%c0_9, %c0_10] : memref<1x128xf32, #tpu.memory_space<vmem>>, vector<1x128xf32>
    %11 = vector.broadcast %10 : vector<1x128xf32> to vector<8x128xf32>
    %12 = arith.addf %9, %11 : vector<8x128xf32>
    %13 = arith.negf %12 : vector<8x128xf32>
    %14 = math.exp %13 : vector<8x128xf32>
    %cst_11 = arith.constant 1.000000e+00 : f32
    %15 = vector.broadcast %cst_11 : f32 to vector<8x128xf32>
    %16 = arith.addf %15, %14 : vector<8x128xf32>
    %17 = arith.divf %15, %16 : vector<8x128xf32>
    %c0_12 = arith.constant 0 : index
    %c0_13 = arith.constant 0 : index
    %18 = vector.load %arg6[%c0_12, %c0_13] : memref<8x128xf32, #tpu.memory_space<vmem>>, vector<8x128xf32>
    tpu.vector_store %arg6[%c0_12, %c0_13], %17 {strides = array<i32>} : memref<8x128xf32, #tpu.memory_space<vmem>>, vector<8x128xf32>,
    return
  }
  func.func @transform_0(%arg0: i32) -> (i32, i32) {
    %c0_i32 = arith.constant 0 : i32
    %c0_i32_0 = arith.constant 0 : i32
    return %arg0, %c0_i32 : i32, i32
  }
  func.func @transform_1(%arg0: i32) -> (i32, i32) {
    %c0_i32 = arith.constant 0 : i32
    %c0_i32_0 = arith.constant 0 : i32
    %c0_i32_1 = arith.constant 0 : i32
    return %c0_i32, %c0_i32_0 : i32, i32
  }
  func.func @transform_2(%arg0: i32) -> (i32, i32) {
    %c0_i32 = arith.constant 0 : i32
    %c0_i32_0 = arith.constant 0 : i32
    %c0_i32_1 = arith.constant 0 : i32
    return %c0_i32, %c0_i32_0 : i32, i32
  }
  func.func @transform_3(%arg0: i32) -> (i32, i32) {
    %c0_i32 = arith.constant 0 : i32
    %c0_i32_0 = arith.constant 0 : i32
    %c0_i32_1 = arith.constant 0 : i32
    return %c0_i32, %c0_i32_0 : i32, i32
  }
  func.func @transform_4(%arg0: i32) -> (i32, i32) {
    %c0_i32 = arith.constant 0 : i32
    %c0_i32_0 = arith.constant 0 : i32
    %c0_i32_1 = arith.constant 0 : i32
    return %c0_i32, %c0_i32_0 : i32, i32
  }
  func.func @transform_5(%arg0: i32) -> (i32, i32) {
    %c0_i32 = arith.constant 0 : i32
    %c0_i32_0 = arith.constant 0 : i32
    return %arg0, %c0_i32 : i32, i32
  }
}

</mosaic_0001>

<llo_original>
// kernel: vnet_forward.1
$region0: #{vnet_forward.1}
  #allocation0 [shape = 'u32[]', space=smem, size = 0x4, offset = 0x4, fixed_abs, tag = 'smem constant byte address 0x4 - core index']
  #allocation1 [shape = 'u32[144,128]{1,0:T(1,128)}', space=vmem, size = 0x12000, scoped, tag = 'internal scratch']
  %s0 = inlined_call_operand.hbm [shape: f32[16,32], index: 0, kind: input, shape index: {}]
  %s1 = inlined_call_operand.hbm [shape: f32[32,32], index: 1, kind: input, shape index: {}]
  %s2 = inlined_call_operand.hbm [shape: f32[1,32], index: 2, kind: input, shape index: {}]
  %s3 = inlined_call_operand.hbm [shape: f32[32,128], index: 3, kind: input, shape index: {}]
  %s4 = inlined_call_operand.vmem [shape: f32[1,128], index: 4, kind: input, shape index: {}]
  %s5 = inlined_call_operand.hbm [shape: f32[16,128], index: 5, kind: output, shape index: {}]
  %s6 = sld [smem:[#allocation0]]
  $region69: #{vnet_forward.1} parent=0
    _
  %s8 = ssub.s32 1, %s6
  %s9 = scalar_select 0, %s8, %s6
  $region1: #{vnet_forward.1} parent=0
    #allocation2 [shape = 'u8[8192]{0}', space=vmem, size = 0x2000, scoped, tag = 'input window, operand 0']
    #allocation3 [shape = 's32[2]{0}', space=sflag, size = 0x8, scoped, tag = 'scoped memory for vnet_forward.1']
    #allocation4 [shape = 's32[2]{0}', space=sflag, size = 0x8, scoped, tag = 'scoped memory for vnet_forward.1']
    #allocation5 [shape = 'u8[16384]{0}', space=vmem, size = 0x4000, scoped, tag = 'input window, operand 1, single buffered']
    #allocation6 [shape = 's32[1]{0}', space=sflag, size = 0x4, scoped, tag = 'scoped memory for vnet_forward.1']
    #allocation7 [shape = 'u8[512]{0}', space=vmem, size = 0x400, scoped, tag = 'input window, operand 2, single buffered']
    #allocation8 [shape = 'u8[16384]{0}', space=vmem, size = 0x4000, scoped, tag = 'input window, operand 3, single buffered']
    #allocation9 [shape = 's32[1]{0}', space=sflag, size = 0x4, scoped, tag = 'scoped memory for vnet_forward.1']
    #allocation10 [shape = 'u8[8192]{0}', space=vmem, size = 0x2000, scoped, tag = 'output window, operand 0']
    %10 = vsyncpa [#allocation3], 0
    %s11 = scalar_lea.sflag [#allocation3], 1
    %12 = vsyncpa %s11, 0
    %13 = vsyncpa [#allocation6], 0
    %14 = vsyncpa [#allocation9], 0
    %15 = vsyncpa [#allocation4], 0
    %s16 = scalar_lea.sflag [#allocation4], 1
    %17 = vsyncpa %s16, 0
    loop: start=0, step=1, limit=4
    $region2: #{vnet_forward.1} parent=1 // loop_pre_header
      _
    $region3: #{vnet_forward.1} parent=1 // loop_header
      %s19 = sphi 0, %s23
      %p20 = scmp.ge.s32.totalorder %s19, 4
      %s29 = sphi 0, %s31
      %s32 = sphi 0, %s29
      %s33 = sphi 0, %s32
      %s49 = sphi 0, %s33
      %s53 = sphi 0, %s53
      %s55 = sphi 0, %s53
      %s56 = sphi 0, %s55
      %s70 = sphi 0, %s56
      %s74 = sphi 0, %s74
      %s76 = sphi 0, %s74
      %s77 = sphi 0, %s76
      %s91 = sphi 0, %s77
      %s95 = sphi 0, %s95
      %s97 = sphi 0, %s95
      %s98 = sphi 0, %s97
      %s112 = sphi 0, %s98
      %s116 = sphi 0, %s116
      %s118 = sphi 0, %s116
      %s119 = sphi 0, %s118
      %s133 = sphi 0, %s119
      %s139 = sphi 0, %s141
      %s142 = sphi 0, %s139
      %s143 = sphi 0, %s142
      %s159 = sphi 0, %s143
    $region4: #{vnet_forward.1} parent=1 // loop_header_branch
      %22 = sbr.rel (%p20) target = $region8
    $region5: #{vnet_forward.1} parent=1 // loop_body
      %s24 = ssub.s32 %s19, 1
      %s25 = ssub.s32 %s19, 2
      %s26 = sadd.s32 %s19, 1
      %s27 = ssub.s32 %s19, %s26
      %p28 = scmp.eq.s32.totalorder %s27, 0
      %s30 = sadd.s32 %s29, 1
      %s31 = scalar_select %p28, %s29, %s30
      %p34 = pneg %p28
      %p35 = scmp.eq.s32.totalorder %s19, 1
      %p36 = por %p34, %p35
      %p37 = scmp.ne.s32.totalorder %s29, %s32
      %p38 = scmp.eq.s32.totalorder %s19, 0
      %p39 = por %p37, %p38
      %p40 = scmp.ne.s32.totalorder %s29, %s32
      %p41 = scmp.eq.s32.totalorder %s24, 1
      %p42 = por %p40, %p41
      %p43 = scmp.ne.s32.totalorder %s32, %s33
      %p44 = scmp.eq.s32.totalorder %s24, 0
      %p45 = por %p43, %p44
      %p46 = scmp.ne.s32.totalorder %s32, %s33
      %p47 = scmp.eq.s32.totalorder %s25, 1
      %p48 = por %p46, %p47
      %p50 = scmp.ne.s32.totalorder %s33, %s49
      %p51 = scmp.eq.s32.totalorder %s25, 0
      %p52 = por %p50, %p51
      %s54 = sadd.s32 %s53, 1
      %p57 = scmp.eq.s32.totalorder %s19, 1
      %p58 = scmp.ne.s32.totalorder %s53, %s55
      %p59 = scmp.eq.s32.totalorder %s19, 0
      %p60 = por %p58, %p59
      %p61 = scmp.ne.s32.totalorder %s53, %s55
      %p62 = scmp.eq.s32.totalorder %s24, 1
      %p63 = por %p61, %p62
      %p64 = scmp.ne.s32.totalorder %s55, %s56
      %p65 = scmp.eq.s32.totalorder %s24, 0
      %p66 = por %p64, %p65
      %p67 = scmp.ne.s32.totalorder %s55, %s56
      %p68 = scmp.eq.s32.totalorder %s25, 1
      %p69 = por %p67, %p68
      %p71 = scmp.ne.s32.totalorder %s56, %s70
      %p72 = scmp.eq.s32.totalorder %s25, 0
      %p73 = por %p71, %p72
      %s75 = sadd.s32 %s74, 1
      %p78 = scmp.eq.s32.totalorder %s19, 1
      %p79 = scmp.ne.s32.totalorder %s74, %s76
      %p80 = scmp.eq.s32.totalorder %s19, 0
      %p81 = por %p79, %p80
      %p82 = scmp.ne.s32.totalorder %s74, %s76
      %p83 = scmp.eq.s32.totalorder %s24, 1
      %p84 = por %p82, %p83
      %p85 = scmp.ne.s32.totalorder %s76, %s77
      %p86 = scmp.eq.s32.totalorder %s24, 0
      %p87 = por %p85, %p86
      %p88 = scmp.ne.s32.totalorder %s76, %s77
      %p89 = scmp.eq.s32.totalorder %s25, 1
      %p90 = por %p88, %p89
      %p92 = scmp.ne.s32.totalorder %s77, %s91
      %p93 = scmp.eq.s32.totalorder %s25, 0
      %p94 = por %p92, %p93
      %s96 = sadd.s32 %s95, 1
      %p99 = scmp.eq.s32.totalorder %s19, 1
      %p100 = scmp.ne.s32.totalorder %s95, %s97
      %p101 = scmp.eq.s32.totalorder %s19, 0
      %p102 = por %p100, %p101
      %p103 = scmp.ne.s32.totalorder %s95, %s97
      %p104 = scmp.eq.s32.totalorder %s24, 1
      %p105 = por %p103, %p104
      %p106 = scmp.ne.s32.totalorder %s97, %s98
      %p107 = scmp.eq.s32.totalorder %s24, 0
      %p108 = por %p106, %p107
      %p109 = scmp.ne.s32.totalorder %s97, %s98
      %p110 = scmp.eq.s32.totalorder %s25, 1
      %p111 = por %p109, %p110
      %p113 = scmp.ne.s32.totalorder %s98, %s112
      %p114 = scmp.eq.s32.totalorder %s25, 0
      %p115 = por %p113, %p114
      %s117 = sadd.s32 %s116, 1
      %p120 = scmp.eq.s32.totalorder %s19, 1
      %p121 = scmp.ne.s32.totalorder %s116, %s118
      %p122 = scmp.eq.s32.totalorder %s19, 0
      %p123 = por %p121, %p122
      %p124 = scmp.ne.s32.totalorder %s116, %s118
      %p125 = scmp.eq.s32.totalorder %s24, 1
      %p126 = por %p124, %p125
      %p127 = scmp.ne.s32.totalorder %s118, %s119
      %p128 = scmp.eq.s32.totalorder %s24, 0
      %p129 = por %p127, %p128
      %p130 = scmp.ne.s32.totalorder %s118, %s119
      %p131 = scmp.eq.s32.totalorder %s25, 1
      %p132 = por %p130, %p131
      %p134 = scmp.ne.s32.totalorder %s119, %s133
      %p135 = scmp.eq.s32.totalorder %s25, 0
      %p136 = por %p134, %p135
      %s137 = ssub.s32 %s19, %s26
      %p138 = scmp.eq.s32.totalorder %s137, 0
      %s140 = sadd.s32 %s139, 1
      %s141 = scalar_select %p138, %s139, %s140
      %p144 = pneg %p138
      %p145 = scmp.eq.s32.totalorder %s19, 1
      %p146 = por %p144, %p145
      %p147 = scmp.ne.s32.totalorder %s139, %s142
      %p148 = scmp.eq.s32.totalorder %s19, 0
      %p149 = por %p147, %p148
      %p150 = scmp.ne.s32.totalorder %s139, %s142
      %p151 = scmp.eq.s32.totalorder %s24, 1
      %p152 = por %p150, %p151
      %p153 = scmp.ne.s32.totalorder %s142, %s143
      %p154 = scmp.eq.s32.totalorder %s24, 0
      %p155 = por %p153, %p154
      %p156 = scmp.ne.s32.totalorder %s142, %s143
      %p157 = scmp.eq.s32.totalorder %s25, 1
      %p158 = por %p156, %p157
      %p160 = scmp.ne.s32.totalorder %s143, %s159
      %p161 = scmp.eq.s32.totalorder %s25, 0
      %p162 = por %p160, %p161
      %p163 = scmp.le.s32.totalorder 1, %s19
      %p164 = scmp.lt.s32.totalorder %s19, 3
      %p165 = pnand %p163, %p164
      %p166 = pneg %p165
      // Predicated region
      $region9: #{vnet_forward.1} parent=5 // pred_check
        _
      $region10: #{vnet_forward.1} parent=5 // pred_check_branch
        %168 = sbr.rel (%p165) target = $region12
      $region11: #{vnet_forward.1} parent=5 // pred_region
        %s169 = ssub.s32 %s19, 1
        // Predicated region
        $region13: #{vnet_forward.1} parent=11 // pred_check
          %p170 = pneg %p66
        $region14: #{vnet_forward.1} parent=11 // pred_check_branch
          %172 = sbr.rel (%p170) target = $region16
        $region15: #{vnet_forward.1} parent=11 // pred_region
          %s174 = ssub.s32 512, 512
          %175 = vsyncadd [#allocation6], %s174
          %s176 = sshll.u32 [#allocation5], 4
          %s177 = int_to_ptr.vmem [resolvable:$true] %s176
          %182 = dma.hbm_to_vmem [thread:$0]  %s1, 512, %s177, [#allocation6], 128, 128, 8
        $region16: #{vnet_forward.1} parent=11 // pred_fallthru
          _
        // Predicated region
        $region17: #{vnet_forward.1} parent=11 // pred_check
          %p183 = pneg %p87
        $region18: #{vnet_forward.1} parent=11 // pred_check_branch
          %185 = sbr.rel (%p183) target = $region20
        $region19: #{vnet_forward.1} parent=11 // pred_region
          %s187 = ssub.s32 16, 16
          %188 = vsyncadd [#allocation6], %s187
          %s190 = sshll.u32 [#allocation7], 4
          %s191 = int_to_ptr.vmem [resolvable:$true] %s190
          %193 = dma.hbm_to_vmem [thread:$0]  %s2, 16, %s191, [#allocation6]
        $region20: #{vnet_forward.1} parent=11 // pred_fallthru
          _
        // Predicated region
        $region21: #{vnet_forward.1} parent=11 // pred_check
          %p194 = pneg %p108
        $region22: #{vnet_forward.1} parent=11 // pred_check_branch
          %196 = sbr.rel (%p194) target = $region24
        $region23: #{vnet_forward.1} parent=11 // pred_region
          %s198 = ssub.s32 512, 512
          %199 = vsyncadd [#allocation9], %s198
          %s200 = sshll.u32 [#allocation8], 4
          %s201 = int_to_ptr.vmem [resolvable:$true] %s200
          %206 = dma.hbm_to_vmem [thread:$0]  %s3, 512, %s201, [#allocation9], 128, 128, 8
        $region24: #{vnet_forward.1} parent=11 // pred_fallthru
          _
        // Predicated region
        $region25: #{vnet_forward.1} parent=11 // pred_check
          %p207 = pneg %p129
        $region26: #{vnet_forward.1} parent=11 // pred_check_branch
          %209 = sbr.rel (%p207) target = $region28
        $region27: #{vnet_forward.1} parent=11 // pred_region
          _
        $region28: #{vnet_forward.1} parent=11 // pred_fallthru
          _
      $region12: #{vnet_forward.1} parent=5 // pred_fallthru
        _
      %p210 = scmp.lt.s32.totalorder %s19, 2
      // Predicated region
      $region29: #{vnet_forward.1} parent=5 // pred_check
        %p211 = pneg %p210
      $region30: #{vnet_forward.1} parent=5 // pred_check_branch
        %213 = sbr.rel (%p211) target = $region32
      $region31: #{vnet_forward.1} parent=5 // pred_region
        // Predicated region
        $region33: #{vnet_forward.1} parent=31 // pred_check
          %p214 = pneg %p39
        $region34: #{vnet_forward.1} parent=31 // pred_check_branch
          %216 = sbr.rel (%p214) target = $region36
        $region35: #{vnet_forward.1} parent=31 // pred_region
          %s217 = sand.u32 %s29, 1
          %s218 = scalar_lea.sflag [#allocation3], %s217
          %s219 = sand.u32 %s29, 1
          %s220 = smul.addr %s219, 8
          %s221 = scalar_lea.vmem [#allocation2], %s220
          %s223 = ssub.s32 128, 128
          %224 = vsyncadd %s218, %s223
          %s225 = smul.addr %s19, 128
          %s226 = scalar_lea.hbm %s0, %s225
          %s228 = sshll.u32 %s221, 4
          %s229 = int_to_ptr.vmem [resolvable:$true] %s228
          %231 = dma.hbm_to_vmem [thread:$0]  %s226, 128, %s229, %s218
        $region36: #{vnet_forward.1} parent=31 // pred_fallthru
          _
      $region32: #{vnet_forward.1} parent=5 // pred_fallthru
        _
      %p232 = scmp.le.s32.totalorder 1, %s19
      %p233 = scmp.lt.s32.totalorder %s19, 3
      %p234 = pnand %p232, %p233
      %p235 = pneg %p234
      // Predicated region
      $region37: #{vnet_forward.1} parent=5 // pred_check
        _
      $region38: #{vnet_forward.1} parent=5 // pred_check_branch
        %237 = sbr.rel (%p234) target = $region40
      $region39: #{vnet_forward.1} parent=5 // pred_region
        %s238 = ssub.s32 %s19, 1
        %s239 = sand.u32 %s32, 1
        %s240 = scalar_lea.sflag [#allocation3], %s239
        %s241 = sand.u32 %s32, 1
        %s242 = smul.addr %s241, 8
        %s243 = scalar_lea.vmem [#allocation2], %s242
        // Predicated region
        $region41: #{vnet_forward.1} parent=39 // pred_check
          %p244 = pneg %p45
        $region42: #{vnet_forward.1} parent=39 // pred_check_branch
          %246 = sbr.rel (%p244) target = $region44
        $region43: #{vnet_forward.1} parent=39 // pred_region
          %247 = dma.done %s240, 128
        $region44: #{vnet_forward.1} parent=39 // pred_fallthru
          _
        // Predicated region
        $region45: #{vnet_forward.1} parent=39 // pred_check
          %p248 = pneg %p66
        $region46: #{vnet_forward.1} parent=39 // pred_check_branch
          %250 = sbr.rel (%p248) target = $region48
        $region47: #{vnet_forward.1} parent=39 // pred_region
          %251 = dma.done [#allocation6], 512
        $region48: #{vnet_forward.1} parent=39 // pred_fallthru
          _
        // Predicated region
        $region49: #{vnet_forward.1} parent=39 // pred_check
          %p252 = pneg %p87
        $region50: #{vnet_forward.1} parent=39 // pred_check_branch
          %254 = sbr.rel (%p252) target = $region52
        $region51: #{vnet_forward.1} parent=39 // pred_region
          %255 = dma.done [#allocation6], 16
        $region52: #{vnet_forward.1} parent=39 // pred_fallthru
          _
        // Predicated region
        $region53: #{vnet_forward.1} parent=39 // pred_check
          %p256 = pneg %p108
        $region54: #{vnet_forward.1} parent=39 // pred_check_branch
          %258 = sbr.rel (%p256) target = $region56
        $region55: #{vnet_forward.1} parent=39 // pred_region
          %259 = dma.done [#allocation9], 512
        $region56: #{vnet_forward.1} parent=39 // pred_fallthru
          _
        %s260 = sand.u32 %s32, 1
        %s261 = scalar_lea.sflag [#allocation3], %s260
        %s262 = sand.u32 %s32, 1
        %s263 = smul.addr %s262, 8
        %s264 = scalar_lea.vmem [#allocation2], %s263
        %p265 = pneg %p45
        %p266 = pneg %p42
        %p267 = pneg %p66
        %p268 = pneg %p63
        %p269 = pneg %p87
        %p270 = pneg %p84
        %p271 = pneg %p108
        %p272 = pneg %p105
        %p273 = pneg %p129
        %p274 = pneg %p126
        %p275 = pneg %p155
        %p276 = pneg %p152
        %s277 = sand.u32 %s142, 1
        %s278 = scalar_lea.sflag [#allocation4], %s277
        %s279 = sand.u32 %s142, 1
        %s280 = smul.addr %s279, 8
        %s281 = scalar_lea.vmem [#allocation10], %s280
        %v282 = vld [vmem:[%s243] sm:$0xff]
        %v283 = vld [vmem:[#allocation5] sm:$0xff]
        %v284 = vld [vmem:[#allocation5 + $0x8] sm:$0xff]
        %v285 = vld [vmem:[#allocation5 + $0x10] sm:$0xff]
        %v286 = vld [vmem:[#allocation5 + $0x18] sm:$0xff]
        %v287 = vld [vmem:[#allocation7] sm:$0x1]
        %v289 = vlaneseq
        %v290 = vshrl.u32 %v289, 7
        %v291 = vsub.s32 0, %v290
        %v292 = vrot.slane %v287, %v291
        %vm294 = vcmask 261120
        %v296 = vsel %vm294, %v282, 0
        %298 = vmatprep.subr.mxu0 0.0
        %299 = vmatpush1.msra.mxu0 0.0
        %300 = vmatprep.subr.mxu0 0.0
        %301 = vmatpush1.msra.mxu0 0.0
        %302 = vmatprep.subr.mxu0 0.0
        %303 = vmatpush1.msra.mxu0 0.0
        %304 = vmatprep.subr.mxu0 0.0
        %305 = vmatpush1.msra.mxu0 0.0
        %306 = vmatprep.subr.mxu0 0.0
        %307 = vmatpush1.msra.mxu0 0.0
        %308 = vmatprep.subr.mxu0 0.0
        %309 = vmatpush1.msra.mxu0 0.0
        %310 = vmatprep.subr.mxu0 0.0
        %311 = vmatpush1.msra.mxu0 0.0
        %312 = vmatprep.subr.mxu0 0.0
        %313 = vmatpush1.msra.mxu0 0.0
        %314 = vmatprep.subr.mxu0 0.0
        %315 = vmatpush1.msra.mxu0 0.0
        %316 = vmatprep.subr.mxu0 0.0
        %317 = vmatpush1.msra.mxu0 0.0
        %318 = vmatprep.subr.mxu0 0.0
        %319 = vmatpush1.msra.mxu0 0.0
        %320 = vmatprep.subr.mxu0 0.0
        %321 = vmatpush1.msra.mxu0 0.0
        %322 = vmatprep.subr.mxu0 0.0
        %323 = vmatpush1.msra.mxu0 %v286
        %324 = vmatprep.subr.mxu0 0.0
        %325 = vmatpush1.msra.mxu0 %v285
        %326 = vmatprep.subr.mxu0 0.0
        %327 = vmatpush1.msra.mxu0 %v284
        %328 = vmatprep.subr.mxu0 0.0
        %329 = vmatpush1.msra.mxu0 %v283
        %330 = vmatprep.subr.mxu0 0.0
        %331 = vmatpush2.msra.mxu0 0.0
        %332 = vmatprep.subr.mxu0 0.0
        %333 = vmatpush2.msra.mxu0 0.0
        %334 = vmatprep.subr.mxu0 0.0
        %335 = vmatpush2.msra.mxu0 0.0
        %336 = vmatprep.subr.mxu0 0.0
        %337 = vmatpush2.msra.mxu0 0.0
        %338 = vmatprep.subr.mxu0 0.0
        %339 = vmatpush2.msra.mxu0 0.0
        %340 = vmatprep.subr.mxu0 0.0
        %341 = vmatpush2.msra.mxu0 0.0
        %342 = vmatprep.subr.mxu0 0.0
        %343 = vmatpush2.msra.mxu0 0.0
        %344 = vmatprep.subr.mxu0 0.0
        %345 = vmatpush2.msra.mxu0 0.0
        %346 = vmatprep.subr.mxu0 0.0
        %347 = vmatpush2.msra.mxu0 0.0
        %348 = vmatprep.subr.mxu0 0.0
        %349 = vmatpush2.msra.mxu0 0.0
        %350 = vmatprep.subr.mxu0 0.0
        %351 = vmatpush2.msra.mxu0 0.0
        %352 = vmatprep.subr.mxu0 0.0
        %353 = vmatpush2.msra.mxu0 0.0
        %354 = vmatprep.subr.mxu0 0.0
        %355 = vmatpush2.msra.mxu0 0.0
        %356 = vmatprep.subr.mxu0 0.0
        %357 = vmatpush2.msra.mxu0 0.0
        %358 = vmatprep.subr.mxu0 0.0
        %359 = vmatpush2.msra.mxu0 0.0
        %360 = vmatprep.subr.mxu0 0.0
        %361 = vmatpush2.msra.mxu0 0.0
        %362 = vmatprep.mubr.f32.mxu0 0.0
        %363 = vmatmul.mubr.f32.gmra.mxu0 %v296
        %v364 = vpop.f32.mrf.mxu0
        %v365 = vadd.f32 %v292, %v364
        %v366 = vpop.f32.mrf.mxu0
        %367 = vdwg.mxu0
        %v368 = vmax.f32 %v365, 0.0
        %v369 = vld [vmem:[#allocation8] sm:$0xff]
        %v370 = vld [vmem:[#allocation8 + $0x8] sm:$0xff]
        %v371 = vld [vmem:[#allocation8 + $0x10] sm:$0xff]
        %v372 = vld [vmem:[#allocation8 + $0x18] sm:$0xff]
        %v373 = vld [vmem:[%s4] sm:$0x1]
        %v375 = vlaneseq
        %v376 = vshrl.u32 %v375, 7
        %v377 = vsub.s32 0, %v376
        %v378 = vrot.slane %v373, %v377
        %v381 = vsel %vm294, %v368, 0
        %383 = vmatprep.subr.mxu0 0.0
        %384 = vmatpush1.msra.mxu0 0.0
        %385 = vmatprep.subr.mxu0 0.0
        %386 = vmatpush1.msra.mxu0 0.0
        %387 = vmatprep.subr.mxu0 0.0
        %388 = vmatpush1.msra.mxu0 0.0
        %389 = vmatprep.subr.mxu0 0.0
        %390 = vmatpush1.msra.mxu0 0.0
        %391 = vmatprep.subr.mxu0 0.0
        %392 = vmatpush1.msra.mxu0 0.0
        %393 = vmatprep.subr.mxu0 0.0
        %394 = vmatpush1.msra.mxu0 0.0
        %395 = vmatprep.subr.mxu0 0.0
        %396 = vmatpush1.msra.mxu0 0.0
        %397 = vmatprep.subr.mxu0 0.0
        %398 = vmatpush1.msra.mxu0 0.0
        %399 = vmatprep.subr.mxu0 0.0
        %400 = vmatpush1.msra.mxu0 0.0
        %401 = vmatprep.subr.mxu0 0.0
        %402 = vmatpush1.msra.mxu0 0.0
        %403 = vmatprep.subr.mxu0 0.0
        %404 = vmatpush1.msra.mxu0 0.0
        %405 = vmatprep.subr.mxu0 0.0
        %406 = vmatpush1.msra.mxu0 0.0
        %407 = vmatprep.subr.mxu0 0.0
        %408 = vmatpush1.msra.mxu0 %v372
        %409 = vmatprep.subr.mxu0 0.0
        %410 = vmatpush1.msra.mxu0 %v371
        %411 = vmatprep.subr.mxu0 0.0
        %412 = vmatpush1.msra.mxu0 %v370
        %413 = vmatprep.subr.mxu0 0.0
        %414 = vmatpush1.msra.mxu0 %v369
        %415 = vmatprep.subr.mxu0 0.0
        %416 = vmatpush2.msra.mxu0 0.0
        %417 = vmatprep.subr.mxu0 0.0
        %418 = vmatpush2.msra.mxu0 0.0
        %419 = vmatprep.subr.mxu0 0.0
        %420 = vmatpush2.msra.mxu0 0.0
        %421 = vmatprep.subr.mxu0 0.0
        %422 = vmatpush2.msra.mxu0 0.0
        %423 = vmatprep.subr.mxu0 0.0
        %424 = vmatpush2.msra.mxu0 0.0
        %425 = vmatprep.subr.mxu0 0.0
        %426 = vmatpush2.msra.mxu0 0.0
        %427 = vmatprep.subr.mxu0 0.0
        %428 = vmatpush2.msra.mxu0 0.0
        %429 = vmatprep.subr.mxu0 0.0
        %430 = vmatpush2.msra.mxu0 0.0
        %431 = vmatprep.subr.mxu0 0.0
        %432 = vmatpush2.msra.mxu0 0.0
        %433 = vmatprep.subr.mxu0 0.0
        %434 = vmatpush2.msra.mxu0 0.0
        %435 = vmatprep.subr.mxu0 0.0
        %436 = vmatpush2.msra.mxu0 0.0
        %437 = vmatprep.subr.mxu0 0.0
        %438 = vmatpush2.msra.mxu0 0.0
        %439 = vmatprep.subr.mxu0 0.0
        %440 = vmatpush2.msra.mxu0 0.0
        %441 = vmatprep.subr.mxu0 0.0
        %442 = vmatpush2.msra.mxu0 0.0
        %443 = vmatprep.subr.mxu0 0.0
        %444 = vmatpush2.msra.mxu0 0.0
        %445 = vmatprep.subr.mxu0 0.0
        %446 = vmatpush2.msra.mxu0 0.0
        %447 = vmatprep.mubr.f32.mxu0 0.0
        %448 = vmatmul.mubr.f32.gmra.mxu0 %v381
        %v449 = vpop.f32.mrf.mxu0
        %v450 = vadd.f32 %v378, %v449
        %v451 = vpop.f32.mrf.mxu0
        %452 = vdwg.mxu0
        %v453 = vxor.u32 %v450, 2147483648
        %v454 = vmul.f32 %v453, 1.442695
        %v455 = vpow.pop %v454
        %v456 = vadd.f32 %v455, 1.0
        %v457 = vrcp.pop %v456
        %v458 = vmul.f32 1.0, %v457
        %459 = vst [vmem:[%s281] sm:$0xff] %v458
        %s460 = sand.u32 %s142, 1
        %s461 = scalar_lea.sflag [#allocation4], %s460
        %s462 = sand.u32 %s142, 1
        %s463 = smul.addr %s462, 8
        %s464 = scalar_lea.vmem [#allocation10], %s463
        // Predicated region
        $region57: #{vnet_forward.1} parent=39 // pred_check
          %p465 = pneg %p152
        $region58: #{vnet_forward.1} parent=39 // pred_check_branch
          %467 = sbr.rel (%p465) target = $region60
        $region59: #{vnet_forward.1} parent=39 // pred_region
          %s469 = ssub.s32 128, 128
          %470 = vsyncadd %s461, %s469
          %s471 = smul.addr %s24, 128
          %s472 = scalar_lea.hbm %s5, %s471
          %s474 = sshll.u32 %s464, 4
          %s475 = int_to_ptr.vmem [resolvable:$true] %s474
          %477 = dma.vmem_to_hbm [thread:$0]  %s475, 128, %s472, %s461
        $region60: #{vnet_forward.1} parent=39 // pred_fallthru
          _
      $region40: #{vnet_forward.1} parent=5 // pred_fallthru
        _
      %p478 = scmp.le.s32.totalorder 2, %s19
      // Predicated region
      $region61: #{vnet_forward.1} parent=5 // pred_check
        %p479 = pneg %p478
      $region62: #{vnet_forward.1} parent=5 // pred_check_branch
        %481 = sbr.rel (%p479) target = $region64
      $region63: #{vnet_forward.1} parent=5 // pred_region
        %s482 = ssub.s32 %s19, 2
        // Predicated region
        $region65: #{vnet_forward.1} parent=63 // pred_check
          %p483 = pneg %p158
        $region66: #{vnet_forward.1} parent=63 // pred_check_branch
          %485 = sbr.rel (%p483) target = $region68
        $region67: #{vnet_forward.1} parent=63 // pred_region
          %s486 = sand.u32 %s143, 1
          %s487 = scalar_lea.sflag [#allocation4], %s486
          %s488 = sand.u32 %s143, 1
          %s489 = smul.addr %s488, 8
          %s490 = scalar_lea.vmem [#allocation10], %s489
          %491 = dma.done %s487, 128
        $region68: #{vnet_forward.1} parent=63 // pred_fallthru
          _
      $region64: #{vnet_forward.1} parent=5 // pred_fallthru
        _
    $region6: #{vnet_forward.1} parent=1 // loop_footer
      %s23 = sadd.s32 1, %s19
    $region7: #{vnet_forward.1} parent=1 // loop_footer_branch
      %18 = sbr.rel target = $region3
    $region8: #{vnet_forward.1} parent=1 // loop_exit
      _
    %492 = vsyncpa [#allocation3], 1
    %s493 = scalar_lea.sflag [#allocation3], 1
    %494 = vsyncpa %s493, 1
    %495 = vsyncpa [#allocation6], 1
    %496 = vsyncpa [#allocation9], 1
    %497 = vsyncpa [#allocation4], 1
    %s498 = scalar_lea.sflag [#allocation4], 1
    %499 = vsyncpa %s498, 1

</llo_original>
